<compile_context>
chip_gen: v7x
topology: tpu7x:2x2x1
jax: 0.10.0
libtpu: 0.0.40
codegen_flags: <defaults>
</compile_context>

<pallas_src>
import functools

import jax
import jax.numpy as jnp
from jax.experimental import pallas as pl
from jax.experimental.pallas import tpu as pltpu


def _attention_kernel(xt_ref, w_ref, o_ref, m_ref, l_ref, *, s, ts):
    """Grid = (2, num_tiles).  Pass 0: running max/sum.  Pass 1: write output.

    xt_ref: (D, ts) VMEM   -- x transposed, S on the lane axis
    w_ref : (D, 1)  VMEM   -- Linear weight as a column (resident)
    o_ref : (1, ts) VMEM   -- lane-dense output tile
    m_ref : (1, 1)  VMEM   -- running max of logits
    l_ref : (1, 1)  VMEM   -- running sum of exp(logit - m)
    """
    p = pl.program_id(0)   # 0 = statistics pass, 1 = write pass
    i = pl.program_id(1)   # S-tile index

    # Linear (no bias): VPU multiply + sublane reduce -> (1, ts) lane-dense.
    logits = jnp.sum(xt_ref[...] * w_ref[...], axis=0, keepdims=True)

    # Mask out-of-range lanes of the last tile (only traced if needed).
    if s % ts != 0:
        col = jax.lax.broadcasted_iota(jnp.int32, (1, ts), 1) + i * ts
        masked_logits = jnp.where(col < s, logits, -jnp.inf)
    else:
        masked_logits = logits

    @pl.when((p == 0) & (i == 0))
    def _init():
        m_ref[...] = jnp.full_like(m_ref, -jnp.inf)
        l_ref[...] = jnp.zeros_like(l_ref)

    @pl.when(p == 0)
    def _stats():
        tile_max = jnp.max(masked_logits, axis=1, keepdims=True)      # (1, 1)
        m_new = jnp.maximum(m_ref[...], tile_max)
        e = jnp.exp(masked_logits - m_new)          # invalid lanes -> exp(-inf)=0
        l_ref[...] = (l_ref[...] * jnp.exp(m_ref[...] - m_new)
                      + jnp.sum(e, axis=1, keepdims=True))
        m_ref[...] = m_new

    @pl.when(p == 1)
    def _write():
        e = jnp.exp(logits - m_ref[...])
        # EUP approximate reciprocal instead of a vector divide.
        o_ref[...] = e * pl.reciprocal(l_ref[...], approx=True)


def attention_forward(x, w, b=None, *, max_tile=2048, x_is_transposed=False):
    """Forward pass of Attention(latent_dim).

    x: (S, D) float32 (or (D, S) if x_is_transposed=True)
    w: (1, D) float32  -- nn.Linear(D, 1).weight
    b: ignored -- Softmax(dim=0) is shift-invariant, so the bias is a no-op.
    Returns: (S, 1) float32 attention weights (softmax over the seq axis).
    """
    del b  # mathematically irrelevant for softmax over dim=0
    if x_is_transposed:
        d, s = x.shape
        xt = x
    else:
        s, d = x.shape
        xt = x.T                       # one-time XLA transpose: D on sublanes,
                                       # S on the lane axis (lane-dense kernel)
    wv = jnp.asarray(w, jnp.float32).reshape(d, 1)
    xt = jnp.asarray(xt, jnp.float32)

    # S-tile (lane) size: as large as possible while the double-buffered x
    # slab stays far below the scoped VMEM limit on every generation.
    if s <= max_tile:
        ts = s                                         # single tile per pass
    else:
        ts = max_tile                                  # multiple of 128
        while ts > 256 and 2 * d * ts * 4 > 8 * 1024 * 1024:
            ts //= 2
    num_tiles = pl.cdiv(s, ts)

    kernel = functools.partial(_attention_kernel, s=s, ts=ts)

    out = pl.pallas_call(
        kernel,
        out_shape=jax.ShapeDtypeStruct((1, s), jnp.float32),
        grid_spec=pltpu.PrefetchScalarGridSpec(
            num_scalar_prefetch=0,
            grid=(2, num_tiles),
            in_specs=[
                # x^T tiles stream along S; same tiles re-read in pass 1.
                pl.BlockSpec((d, ts), lambda p, i: (0, i)),
                # weight column stays resident.
                pl.BlockSpec((d, 1), lambda p, i: (0, 0)),
            ],
            # During pass 0 (p == 0) every step maps to block (0, 0), so the
            # output buffer stays resident and nothing is written back until
            # pass 1 overwrites it with real values -> no wasted HBM writes.
            out_specs=pl.BlockSpec((1, ts), lambda p, i: (0, i * p)),
            scratch_shapes=[
                pltpu.VMEM((1, 1), jnp.float32),   # running max  m
                pltpu.VMEM((1, 1), jnp.float32),   # running sum  l
            ],
        ),
        compiler_params=pltpu.CompilerParams(
            # Both axes carry accumulator state -> must be "arbitrary".
            dimension_semantics=("arbitrary", "arbitrary"),
            vmem_limit_bytes=32 * 1024 * 1024,
        ),
        cost_estimate=pl.CostEstimate(
            flops=4 * s * d,            # mul+add per element, two passes
            transcendentals=2 * s,      # exp per element, two passes
            bytes_accessed=8 * s * d + 4 * s,
        ),
    )(xt, wv)

    # (1, S) -> (S, 1): same contiguous data, just the module's output shape.
    return out.reshape(s, 1)


if __name__ == "__main__":
    seq, latent_dim = 8, 32

    key = jax.random.PRNGKey(0)
    kx, kw, kb = jax.random.split(key, 3)

    # nn.Linear default init: U(-1/sqrt(fan_in), 1/sqrt(fan_in)).
    bound = 1.0 / jnp.sqrt(jnp.float32(latent_dim))
    w = jax.random.uniform(kw, (1, latent_dim), jnp.float32, -bound, bound)
    b = jax.random.uniform(kb, (1,), jnp.float32, -bound, bound)

    x = jax.random.normal(kx, (seq, latent_dim), jnp.float32)

    out = attention_forward(x, w, b)
    out = jax.block_until_ready(out)

    # Reference (plain JAX, same semantics as the PyTorch module, bias kept
    # to demonstrate that dropping it in the kernel is exact).
    logits_ref = x @ w.T + b
    ref = jax.nn.softmax(logits_ref, axis=0)

    assert out.shape == (seq, 1)
    assert bool(jnp.allclose(out, ref, atol=2e-3, rtol=2e-3)), (
        f"max err {float(jnp.max(jnp.abs(out - ref)))}"
    )

    print("KERNEL_OK")
</pallas_src>

<mosaic_0001>
module attributes {stable_mosaic.version = 11 : i64} {
  func.func @_attention_kernel(%arg0: i32, %arg1: i32, %arg2: memref<32x8xf32, #tpu.memory_space<vmem>>, %arg3: memref<32x1xf32, #tpu.memory_space<vmem>>, %arg4: memref<1x8xf32, #tpu.memory_space<vmem>>, %arg5: memref<1x1xf32, #tpu.memory_space<vmem>>, %arg6: memref<1x1xf32, #tpu.memory_space<vmem>>) attributes {dimension_semantics = [#tpu.dimension_semantics<arbitrary>, #tpu.dimension_semantics<arbitrary>], iteration_bounds = array<i64: 2, 1>, scalar_prefetch = 0 : i64, scratch_operands = 2 : i64, tpu.core_type = #tpu.core_type<tc>, window_params = [{transform_indices = @transform_0, window_bounds = array<i64: 32, 8>}, {pipeline_mode = #tpu.pipeline_mode<synchronous>, transform_indices = @transform_1, window_bounds = array<i64: 32, 1>}, {transform_indices = @transform_2, window_bounds = array<i64: 1, 8>}]} {
    %c0 = arith.constant 0 : index
    %c0_0 = arith.constant 0 : index
    %0 = vector.load %arg2[%c0, %c0_0] : memref<32x8xf32, #tpu.memory_space<vmem>>, vector<32x8xf32>
    %c0_1 = arith.constant 0 : index
    %c0_2 = arith.constant 0 : index
    %1 = vector.load %arg3[%c0_1, %c0_2] : memref<32x1xf32, #tpu.memory_space<vmem>>, vector<32x1xf32>
    %2 = vector.broadcast %1 : vector<32x1xf32> to vector<32x8xf32>
    %3 = arith.mulf %0, %2 : vector<32x8xf32>
    %cst = arith.constant dense<0.000000e+00> : vector<8xf32>
    %4 = vector.multi_reduction <add>, %3, %cst [0] : vector<32x8xf32> to vector<8xf32>
    %5 = vector.shape_cast %4 : vector<8xf32> to vector<1x8xf32>
    %c0_i32 = arith.constant 0 : i32
    %6 = arith.cmpi eq, %arg0, %c0_i32 : i32
    %c0_i32_3 = arith.constant 0 : i32
    %7 = arith.cmpi eq, %arg1, %c0_i32_3 : i32
    %8 = arith.andi %6, %7 : i1
    %9 = arith.extui %8 : i1 to i32
    %c0_i32_4 = arith.constant 0 : i32
    %10 = arith.cmpi ne, %9, %c0_i32_4 : i32
    scf.if %10 {
      %cst_8 = arith.constant 0xFF800000 : f32
      %17 = vector.broadcast %cst_8 : f32 to vector<1x1xf32>
      %c0_9 = arith.constant 0 : index
      %c0_10 = arith.constant 0 : index
      %18 = vector.load %arg5[%c0_9, %c0_10] : memref<1x1xf32, #tpu.memory_space<vmem>>, vector<1x1xf32>
      tpu.vector_store %arg5[%c0_9, %c0_10], %17 {strides = array<i32>} : memref<1x1xf32, #tpu.memory_space<vmem>>, vector<1x1xf32>,
      %cst_11 = arith.constant 0.000000e+00 : f32
      %19 = vector.broadcast %cst_11 : f32 to vector<1x1xf32>
      %c0_12 = arith.constant 0 : index
      %c0_13 = arith.constant 0 : index
      %20 = vector.load %arg6[%c0_12, %c0_13] : memref<1x1xf32, #tpu.memory_space<vmem>>, vector<1x1xf32>
      tpu.vector_store %arg6[%c0_12, %c0_13], %19 {strides = array<i32>} : memref<1x1xf32, #tpu.memory_space<vmem>>, vector<1x1xf32>,
    } else {
    }
    %c0_i32_5 = arith.constant 0 : i32
    %11 = arith.cmpi eq, %arg0, %c0_i32_5 : i32
    %12 = arith.extui %11 : i1 to i32
    %c0_i32_6 = arith.constant 0 : i32
    %13 = arith.cmpi ne, %12, %c0_i32_6 : i32
    scf.if %13 {
      %cst_8 = arith.constant dense<0xFF800000> : vector<1xf32>
      %17 = vector.multi_reduction <maximumf>, %5, %cst_8 [1] : vector<1x8xf32> to vector<1xf32>
      %18 = vector.shape_cast %17 : vector<1xf32> to vector<1x1xf32>
      %c0_9 = arith.constant 0 : index
      %c0_10 = arith.constant 0 : index
      %19 = vector.load %arg5[%c0_9, %c0_10] : memref<1x1xf32, #tpu.memory_space<vmem>>, vector<1x1xf32>
      %20 = arith.maximumf %19, %18 : vector<1x1xf32>
      %21 = vector.broadcast %20 : vector<1x1xf32> to vector<1x8xf32>
      %22 = arith.subf %5, %21 : vector<1x8xf32>
      %23 = math.exp %22 : vector<1x8xf32>
      %c0_11 = arith.constant 0 : index
      %c0_12 = arith.constant 0 : index
      %24 = vector.load %arg6[%c0_11, %c0_12] : memref<1x1xf32, #tpu.memory_space<vmem>>, vector<1x1xf32>
      %c0_13 = arith.constant 0 : index
      %c0_14 = arith.constant 0 : index
      %25 = vector.load %arg5[%c0_13, %c0_14] : memref<1x1xf32, #tpu.memory_space<vmem>>, vector<1x1xf32>
      %26 = arith.subf %25, %20 : vector<1x1xf32>
      %27 = math.exp %26 : vector<1x1xf32>
      %28 = arith.mulf %24, %27 : vector<1x1xf32>
      %cst_15 = arith.constant dense<0.000000e+00> : vector<1xf32>
      %29 = vector.multi_reduction <add>, %23, %cst_15 [1] : vector<1x8xf32> to vector<1xf32>
      %30 = vector.shape_cast %29 : vector<1xf32> to vector<1x1xf32>
      %31 = arith.addf %28, %30 : vector<1x1xf32>
      %c0_16 = arith.constant 0 : index
      %c0_17 = arith.constant 0 : index
      %32 = vector.load %arg6[%c0_16, %c0_17] : memref<1x1xf32, #tpu.memory_space<vmem>>, vector<1x1xf32>
      tpu.vector_store %arg6[%c0_16, %c0_17], %31 {strides = array<i32>} : memref<1x1xf32, #tpu.memory_space<vmem>>, vector<1x1xf32>,
      %c0_18 = arith.constant 0 : index
      %c0_19 = arith.constant 0 : index
      %33 = vector.load %arg5[%c0_18, %c0_19] : memref<1x1xf32, #tpu.memory_space<vmem>>, vector<1x1xf32>
      tpu.vector_store %arg5[%c0_18, %c0_19], %20 {strides = array<i32>} : memref<1x1xf32, #tpu.memory_space<vmem>>, vector<1x1xf32>,
    } else {
    }
    %c1_i32 = arith.constant 1 : i32
    %14 = arith.cmpi eq, %arg0, %c1_i32 : i32
    %15 = arith.extui %14 : i1 to i32
    %c0_i32_7 = arith.constant 0 : i32
    %16 = arith.cmpi ne, %15, %c0_i32_7 : i32
    scf.if %16 {
      %c0_8 = arith.constant 0 : index
      %c0_9 = arith.constant 0 : index
      %17 = vector.load %arg5[%c0_8, %c0_9] : memref<1x1xf32, #tpu.memory_space<vmem>>, vector<1x1xf32>
      %18 = vector.broadcast %17 : vector<1x1xf32> to vector<1x8xf32>
      %19 = arith.subf %5, %18 : vector<1x8xf32>
      %20 = math.exp %19 : vector<1x8xf32>
      %c0_10 = arith.constant 0 : index
      %c0_11 = arith.constant 0 : index
      %21 = vector.load %arg6[%c0_10, %c0_11] : memref<1x1xf32, #tpu.memory_space<vmem>>, vector<1x1xf32>
      %22 = tpu.reciprocal %21 {approx = true} : vector<1x1xf32> -> vector<1x1xf32>
      %23 = vector.broadcast %22 : vector<1x1xf32> to vector<1x8xf32>
      %24 = arith.mulf %20, %23 : vector<1x8xf32>
      %c0_12 = arith.constant 0 : index
      %c0_13 = arith.constant 0 : index
      %25 = vector.load %arg4[%c0_12, %c0_13] : memref<1x8xf32, #tpu.memory_space<vmem>>, vector<1x8xf32>
      tpu.vector_store %arg4[%c0_12, %c0_13], %24 {strides = array<i32>} : memref<1x8xf32, #tpu.memory_space<vmem>>, vector<1x8xf32>,
    } else {
    }
    return
  }
  func.func @transform_0(%arg0: i32, %arg1: i32) -> (i32, i32) {
    %c0_i32 = arith.constant 0 : i32
    %c0_i32_0 = arith.constant 0 : i32
    return %c0_i32, %arg1 : i32, i32
  }
  func.func @transform_1(%arg0: i32, %arg1: i32) -> (i32, i32) {
    %c0_i32 = arith.constant 0 : i32
    %c0_i32_0 = arith.constant 0 : i32
    %c0_i32_1 = arith.constant 0 : i32
    return %c0_i32, %c0_i32_0 : i32, i32
  }
  func.func @transform_2(%arg0: i32, %arg1: i32) -> (i32, i32) {
    %0 = arith.muli %arg1, %arg0 : i32
    %c0_i32 = arith.constant 0 : i32
    %c0_i32_0 = arith.constant 0 : i32
    return %c0_i32, %0 : i32, i32
  }
}

</mosaic_0001>

<llo_original>
// kernel: tpu_custom_call.1
$region0: #{tpu_custom_call.1}
  #allocation0 [shape = 'u32[]', space=smem, size = 0x4, offset = 0x4, fixed_abs, tag = 'smem constant byte address 0x4 - core index']
  #allocation1 [shape = 'u32[144,128]{1,0:T(1,128)}', space=vmem, size = 0x12000, scoped, tag = 'internal scratch']
  #allocation2 [shape = 'f32[1,1]{1,0:T(1,128)}', space=vmem, size = 0x200, scoped, tag = 'scratch operand']
  #allocation3 [shape = 'f32[1,1]{1,0:T(1,128)}', space=vmem, size = 0x200, scoped, tag = 'scratch operand']
  %s0 = inlined_call_operand.vmem [shape: f32[32,8], index: 0, kind: input, shape index: {}]
  %s1 = inlined_call_operand.vmem [shape: f32[32,1], index: 1, kind: input, shape index: {}]
  %s2 = inlined_call_operand.hbm [shape: f32[1,8], index: 2, kind: output, shape index: {}]
  %s3 = sld [smem:[#allocation0]]
  $region53: #{tpu_custom_call.1} parent=0
    _
  %s5 = ssub.s32 1, %s3
  %s6 = scalar_select 0, %s5, %s3
  $region1: #{tpu_custom_call.1} parent=0
    #allocation4 [shape = 'u8[1024]{0}', space=vmem, size = 0x400, scoped, tag = 'output window, operand 0']
    #allocation5 [shape = 's32[2]{0}', space=sflag, size = 0x8, scoped, tag = 'scoped memory for tpu_custom_call.1']
    %7 = vsyncpa [#allocation5], 0
    %s8 = scalar_lea.sflag [#allocation5], 1
    %9 = vsyncpa %s8, 0
    loop: start=0, step=1, limit=4
    $region2: #{tpu_custom_call.1} parent=1 // loop_pre_header
      _
    $region3: #{tpu_custom_call.1} parent=1 // loop_header
      %s11 = sphi 0, %s15
      %p12 = scmp.ge.s32.totalorder %s11, 4
      %s18 = sphi 0, %s30
      %s19 = sphi 0, %s26
      %s20 = sphi 0, %s18
      %s21 = sphi 0, %s19
      %s22 = sphi 0, %s20
      %s23 = sphi 0, %s21
      %s33 = sphi 0, %s35
      %s36 = sphi 0, %s33
      %s37 = sphi 0, %s36
      %s53 = sphi 0, %s37
      %s57 = sphi 0, %s57
      %s59 = sphi 0, %s57
      %s60 = sphi 0, %s59
      %s74 = sphi 0, %s60
      %s82 = sphi 0, %s84
      %s85 = sphi 0, %s82
      %s86 = sphi 0, %s85
      %s102 = sphi 0, %s86
    $region4: #{tpu_custom_call.1} parent=1 // loop_header_branch
      %14 = sbr.rel (%p12) target = $region8
    $region5: #{tpu_custom_call.1} parent=1 // loop_body
      %s16 = ssub.s32 %s11, 1
      %s17 = ssub.s32 %s11, 2
      %s24 = sadd.s32 1, %s19
      %p25 = scmp.ge.s32.totalorder %s24, 1
      %s26 = scalar_select %p25, 0, %s24
      %s27 = sadd.s32 1, %s18
      %s28 = scalar_select %p25, %s27, %s18
      %p29 = scmp.ge.s32.totalorder %s28, 2
      %s30 = scalar_select %p29, 0, %s28
      %s31 = ssub.s32 %s19, %s26
      %p32 = scmp.eq.s32.totalorder %s31, 0
      %s34 = sadd.s32 %s33, 1
      %s35 = scalar_select %p32, %s33, %s34
      %p38 = pneg %p32
      %p39 = scmp.eq.s32.totalorder %s11, 1
      %p40 = por %p38, %p39
      %p41 = scmp.ne.s32.totalorder %s33, %s36
      %p42 = scmp.eq.s32.totalorder %s11, 0
      %p43 = por %p41, %p42
      %p44 = scmp.ne.s32.totalorder %s33, %s36
      %p45 = scmp.eq.s32.totalorder %s16, 1
      %p46 = por %p44, %p45
      %p47 = scmp.ne.s32.totalorder %s36, %s37
      %p48 = scmp.eq.s32.totalorder %s16, 0
      %p49 = por %p47, %p48
      %p50 = scmp.ne.s32.totalorder %s36, %s37
      %p51 = scmp.eq.s32.totalorder %s17, 1
      %p52 = por %p50, %p51
      %p54 = scmp.ne.s32.totalorder %s37, %s53
      %p55 = scmp.eq.s32.totalorder %s17, 0
      %p56 = por %p54, %p55
      %s58 = sadd.s32 %s57, 1
      %p61 = scmp.eq.s32.totalorder %s11, 1
      %p62 = scmp.ne.s32.totalorder %s57, %s59
      %p63 = scmp.eq.s32.totalorder %s11, 0
      %p64 = por %p62, %p63
      %p65 = scmp.ne.s32.totalorder %s57, %s59
      %p66 = scmp.eq.s32.totalorder %s16, 1
      %p67 = por %p65, %p66
      %p68 = scmp.ne.s32.totalorder %s59, %s60
      %p69 = scmp.eq.s32.totalorder %s16, 0
      %p70 = por %p68, %p69
      %p71 = scmp.ne.s32.totalorder %s59, %s60
      %p72 = scmp.eq.s32.totalorder %s17, 1
      %p73 = por %p71, %p72
      %p75 = scmp.ne.s32.totalorder %s60, %s74
      %p76 = scmp.eq.s32.totalorder %s17, 0
      %p77 = por %p75, %p76
      %s78 = smul.u32 %s19, %s18
      %s79 = smul.u32 %s26, %s30
      %s80 = ssub.s32 %s78, %s79
      %p81 = scmp.eq.s32.totalorder %s80, 0
      %s83 = sadd.s32 %s82, 1
      %s84 = scalar_select %p81, %s82, %s83
      %p87 = pneg %p81
      %p88 = scmp.eq.s32.totalorder %s11, 1
      %p89 = por %p87, %p88
      %p90 = scmp.ne.s32.totalorder %s82, %s85
      %p91 = scmp.eq.s32.totalorder %s11, 0
      %p92 = por %p90, %p91
      %p93 = scmp.ne.s32.totalorder %s82, %s85
      %p94 = scmp.eq.s32.totalorder %s16, 1
      %p95 = por %p93, %p94
      %p96 = scmp.ne.s32.totalorder %s85, %s86
      %p97 = scmp.eq.s32.totalorder %s16, 0
      %p98 = por %p96, %p97
      %p99 = scmp.ne.s32.totalorder %s85, %s86
      %p100 = scmp.eq.s32.totalorder %s17, 1
      %p101 = por %p99, %p100
      %p103 = scmp.ne.s32.totalorder %s86, %s102
      %p104 = scmp.eq.s32.totalorder %s17, 0
      %p105 = por %p103, %p104
      %p106 = scmp.le.s32.totalorder 1, %s11
      %p107 = scmp.lt.s32.totalorder %s11, 3
      %p108 = pnand %p106, %p107
      %p109 = pneg %p108
      // Predicated region
      $region9: #{tpu_custom_call.1} parent=5 // pred_check
        _
      $region10: #{tpu_custom_call.1} parent=5 // pred_check_branch
        %111 = sbr.rel (%p108) target = $region12
      $region11: #{tpu_custom_call.1} parent=5 // pred_region
        %s112 = ssub.s32 %s11, 1
        // Predicated region
        $region13: #{tpu_custom_call.1} parent=11 // pred_check
          %p113 = pneg %p49
        $region14: #{tpu_custom_call.1} parent=11 // pred_check_branch
          %115 = sbr.rel (%p113) target = $region16
        $region15: #{tpu_custom_call.1} parent=11 // pred_region
          %p116 = scmp.lt.s32.totalorder %s21, 0
          %s117 = scalar_select %p116, %s21, 0
          %s118 = smul.addr %s117, 8
          %s119 = scalar_lea.vmem %s0, %s118
        $region16: #{tpu_custom_call.1} parent=11 // pred_fallthru
          _
        // Predicated region
        $region17: #{tpu_custom_call.1} parent=11 // pred_check
          %p120 = pneg %p70
        $region18: #{tpu_custom_call.1} parent=11 // pred_check_branch
          %122 = sbr.rel (%p120) target = $region20
        $region19: #{tpu_custom_call.1} parent=11 // pred_region
          _
        $region20: #{tpu_custom_call.1} parent=11 // pred_fallthru
          _
      $region12: #{tpu_custom_call.1} parent=5 // pred_fallthru
        _
      %p123 = scmp.lt.s32.totalorder %s11, 2
      // Predicated region
      $region21: #{tpu_custom_call.1} parent=5 // pred_check
        %p124 = pneg %p123
      $region22: #{tpu_custom_call.1} parent=5 // pred_check_branch
        %126 = sbr.rel (%p124) target = $region24
      $region23: #{tpu_custom_call.1} parent=5 // pred_region
        _
      $region24: #{tpu_custom_call.1} parent=5 // pred_fallthru
        _
      %p127 = scmp.le.s32.totalorder 1, %s11
      %p128 = scmp.lt.s32.totalorder %s11, 3
      %p129 = pnand %p127, %p128
      %p130 = pneg %p129
      // Predicated region
      $region25: #{tpu_custom_call.1} parent=5 // pred_check
        _
      $region26: #{tpu_custom_call.1} parent=5 // pred_check_branch
        %132 = sbr.rel (%p129) target = $region28
      $region27: #{tpu_custom_call.1} parent=5 // pred_region
        %s133 = ssub.s32 %s11, 1
        %p134 = scmp.lt.s32.totalorder %s21, 0
        %s135 = scalar_select %p134, %s21, 0
        %s136 = smul.addr %s135, 8
        %s137 = scalar_lea.vmem %s0, %s136
        %p138 = pneg %p49
        %p139 = pneg %p46
        %p140 = pneg %p70
        %p141 = pneg %p67
        %p142 = pneg %p98
        %p143 = pneg %p95
        %s144 = sand.u32 %s85, 1
        %s145 = scalar_lea.sflag [#allocation5], %s144
        %s146 = sand.u32 %s85, 1
        %s147 = scalar_lea.vmem [#allocation4], %s146
        %p148 = scmp.lt.s32.totalorder %s21, 0
        %s149 = scalar_select %p148, %s21, 0
        %s150 = smul.addr %s149, 8
        %s151 = scalar_lea.vmem %s0, %s150
        %s152 = smul.u32 %s21, %s20
        %v153 = vld [vmem:[%s151] sm:$0xff]
        %v154 = vld [vmem:[%s151 + $0x8] sm:$0xff]
        %v155 = vld [vmem:[%s151 + $0x10] sm:$0xff]
        %v156 = vld [vmem:[%s151 + $0x18] sm:$0xff]
        %v157 = vld [vmem:[%s1] sm:$0xff]
        %v158 = vld [vmem:[%s1 + $0x8] sm:$0xff]
        %v159 = vld [vmem:[%s1 + $0x10] sm:$0xff]
        %v160 = vld [vmem:[%s1 + $0x18] sm:$0xff]
        %162 = vset.pattern.permute.xlu0 0
        %163 = vperm.xlu0 %162, %v157
        %v164 = vpop.permute.xlu0 %163
        %167 = vset.pattern.permute.xlu0 0
        %168 = vperm.xlu0 %167, %v158
        %v169 = vpop.permute.xlu0 %168
        %172 = vset.pattern.permute.xlu0 0
        %173 = vperm.xlu0 %172, %v159
        %v174 = vpop.permute.xlu0 %173
        %177 = vset.pattern.permute.xlu0 0
        %178 = vperm.xlu0 %177, %v160
        %v179 = vpop.permute.xlu0 %178
        %v181 = vmul.f32 %v153, %v164
        %v182 = vmul.f32 %v154, %v169
        %v183 = vmul.f32 %v155, %v174
        %v184 = vmul.f32 %v156, %v179
        %vm185 = vcmask 64512
        %v186 = vsel %vm185, %v181, 0.0
        %v187 = vsel %vm185, %v182, 0.0
        %v188 = vadd.f32 %v186, %v187
        %v189 = vsel %vm185, %v183, 0.0
        %v190 = vadd.f32 %v188, %v189
        %v191 = vsel %vm185, %v184, 0.0
        %v192 = vadd.f32 %v190, %v191
        %v193 = vrot.slane %v192, 4
        %v194 = vadd.f32 %v192, %v193
        %v195 = vrot.slane %v194, 2
        %v196 = vadd.f32 %v194, %v195
        %v197 = vrot.slane %v196, 1
        %v198 = vadd.f32 %v196, %v197
        %p199 = scmp.eq.s32.totalorder %s20, 0
        %p200 = scmp.eq.s32.totalorder %s21, 0
        %p201 = pnand %p199, %p200
        %p202 = pneg %p201
        // Predicated region
        $region29: #{tpu_custom_call.1} parent=27 // pred_check
          _
        $region30: #{tpu_custom_call.1} parent=27 // pred_check_branch
          %204 = sbr.rel (%p201) target = $region32
        $region31: #{tpu_custom_call.1} parent=27 // pred_region
          %vm205 = vcmask 0
          %206 = vst.msk [vmem:[#allocation2] sm:$0x1] %vm205, -inf
          %207 = vst.msk [vmem:[#allocation3] sm:$0x1] %vm205, 0.0
        $region32: #{tpu_custom_call.1} parent=27 // pred_fallthru
          _
        // Predicated region
        $region33: #{tpu_custom_call.1} parent=27 // pred_check
          %p208 = pneg %p199
        $region34: #{tpu_custom_call.1} parent=27 // pred_check_branch
          %210 = sbr.rel (%p208) target = $region36
        $region35: #{tpu_custom_call.1} parent=27 // pred_region
          %v211 = vsel %vm185, %v198, -inf
          %212 = vmax.xlane.f32.xlu0 %v211
          %v213 = vpop.xlane.xlu0 %212
          %v214 = vld [vmem:[#allocation2] sm:$0x1]
          %v215 = vmax.f32 %v214, %v213
          %217 = vset.pattern.permute.xlu0 0
          %218 = vperm.xlu0 %217, %v215
          %v219 = vpop.permute.xlu0 %218
          %v221 = vlaneseq
          %v222 = vshrl.u32 %v221, 7
          %v223 = vsub.s32 0, %v222
          %v224 = vrot.slane %v219, %v223
          %v225 = vsub.f32 %v198, %v224
          %v226 = vmul.f32 %v225, 1.442695
          %v227 = vpow.pop %v226
          %v228 = vld [vmem:[#allocation3] sm:$0x1]
          %v229 = vsub.f32 %v214, %v215
          %v230 = vmul.f32 %v229, 1.442695
          %v231 = vpow.pop %v230
          %v232 = vmul.f32 %v228, %v231
          %v233 = vsel %vm185, %v227, 0.0
          %234 = vadd.xlane.f32.xlu0 %v233
          %v235 = vpop.xlane.xlu0 %234
          %v236 = vadd.f32 %v232, %v235
          %vm237 = vcmask 0
          %238 = vst.msk [vmem:[#allocation3] sm:$0x1] %vm237, %v236
          %239 = vst.msk [vmem:[#allocation2] sm:$0x1] %vm237, %v215
        $region36: #{tpu_custom_call.1} parent=27 // pred_fallthru
          _
        %p240 = scmp.eq.s32.totalorder %s20, 1
        // Predicated region
        $region37: #{tpu_custom_call.1} parent=27 // pred_check
          %p241 = pneg %p240
        $region38: #{tpu_custom_call.1} parent=27 // pred_check_branch
          %243 = sbr.rel (%p241) target = $region40
        $region39: #{tpu_custom_call.1} parent=27 // pred_region
          %v244 = vld [vmem:[#allocation2] sm:$0x1]
          %246 = vset.pattern.permute.xlu0 0
          %247 = vperm.xlu0 %246, %v244
          %v248 = vpop.permute.xlu0 %247
          %v250 = vlaneseq
          %v251 = vshrl.u32 %v250, 7
          %v252 = vsub.s32 0, %v251
          %v253 = vrot.slane %v248, %v252
          %v254 = vsub.f32 %v198, %v253
          %v255 = vmul.f32 %v254, 1.442695
          %v256 = vpow.pop %v255
          %v257 = vld [vmem:[#allocation3] sm:$0x1]
          %v258 = vrcp.pop %v257
          %260 = vset.pattern.permute.xlu0 0
          %261 = vperm.xlu0 %260, %v258
          %v262 = vpop.permute.xlu0 %261
          %v264 = vlaneseq
          %v265 = vshrl.u32 %v264, 7
          %v266 = vsub.s32 0, %v265
          %v267 = vrot.slane %v262, %v266
          %v268 = vmul.f32 %v256, %v267
          %vm269 = vcmask 57344
          %270 = vst.msk [vmem:[%s147] sm:$0x1] %vm269, %v268
        $region40: #{tpu_custom_call.1} parent=27 // pred_fallthru
          _
        %s271 = sand.u32 %s85, 1
        %s272 = scalar_lea.sflag [#allocation5], %s271
        %s273 = sand.u32 %s85, 1
        %s274 = scalar_lea.vmem [#allocation4], %s273
        // Predicated region
        $region41: #{tpu_custom_call.1} parent=27 // pred_check
          %p275 = pneg %p95
        $region42: #{tpu_custom_call.1} parent=27 // pred_check_branch
          %277 = sbr.rel (%p275) target = $region44
        $region43: #{tpu_custom_call.1} parent=27 // pred_region
          %s278 = smul.u32 %s21, %s20
          %s280 = ssub.s32 16, 16
          %281 = vsyncadd %s272, %s280
          %s282 = smul.addr %s278, 16
          %s283 = scalar_lea.hbm %s2, %s282
          %s285 = sshll.u32 %s274, 4
          %s286 = int_to_ptr.vmem [resolvable:$true] %s285
          %288 = dma.vmem_to_hbm [thread:$0]  %s286, 16, %s283, %s272
        $region44: #{tpu_custom_call.1} parent=27 // pred_fallthru
          _
      $region28: #{tpu_custom_call.1} parent=5 // pred_fallthru
        _
      %p289 = scmp.le.s32.totalorder 2, %s11
      // Predicated region
      $region45: #{tpu_custom_call.1} parent=5 // pred_check
        %p290 = pneg %p289
      $region46: #{tpu_custom_call.1} parent=5 // pred_check_branch
        %292 = sbr.rel (%p290) target = $region48
      $region47: #{tpu_custom_call.1} parent=5 // pred_region
        %s293 = ssub.s32 %s11, 2
        // Predicated region
        $region49: #{tpu_custom_call.1} parent=47 // pred_check
          %p294 = pneg %p101
        $region50: #{tpu_custom_call.1} parent=47 // pred_check_branch
          %296 = sbr.rel (%p294) target = $region52
        $region51: #{tpu_custom_call.1} parent=47 // pred_region
          %s297 = sand.u32 %s86, 1
          %s298 = scalar_lea.sflag [#allocation5], %s297
          %s299 = sand.u32 %s86, 1
          %s300 = scalar_lea.vmem [#allocation4], %s299
          %301 = dma.done %s298, 16
        $region52: #{tpu_custom_call.1} parent=47 // pred_fallthru
          _
      $region48: #{tpu_custom_call.1} parent=5 // pred_fallthru
        _
    $region6: #{tpu_custom_call.1} parent=1 // loop_footer
      %s15 = sadd.s32 1, %s11
    $region7: #{tpu_custom_call.1} parent=1 // loop_footer_branch
      %10 = sbr.rel target = $region3
    $region8: #{tpu_custom_call.1} parent=1 // loop_exit
      _
    %302 = vsyncpa [#allocation5], 1
    %s303 = scalar_lea.sflag [#allocation5], 1
    %304 = vsyncpa %s303, 1

</llo_original>
